<compile_context>
chip_gen: v7x
topology: tpu7x:2x2x1
jax: 0.10.0
libtpu: 0.0.40
codegen_flags: <defaults>
</compile_context>

<pallas_src>
import jax
import jax.numpy as jnp
from jax.experimental import pallas as pl
from jax.experimental.pallas import tpu as pltpu

_MIB = 1024 * 1024


# ----------------------------------------------------------------------------- kernels
def _zero_mul_kernel(x_ref, o_ref):
    # Exact torch.mul(0.0) semantics: NaN*0=NaN, Inf*0=NaN, (-x)*0=-0.0.
    zero = jnp.zeros((), dtype=o_ref.dtype)
    o_ref[...] = (x_ref[...] * zero).astype(o_ref.dtype)


def _zero_fill_kernel(o_ref):
    # Fast path (exact=False): no HBM read at all -> ~2x less DMA traffic.
    o_ref[...] = jnp.zeros_like(o_ref)


# ----------------------------------------------------------------------------- helpers
def _sublane_multiple(*dtypes) -> int:
    # Second-minor block-dim multiple: 8 (32-bit), 16 (16-bit), 32 (8-bit).
    m = 8
    for dt in dtypes:
        item = jnp.dtype(dt).itemsize
        m = max(m, 8 * max(1, 4 // max(1, item)))
    return m


def _vmem_budget():
    """Generation-aware (target_block_bytes, vmem_limit_bytes)."""
    try:
        info = pltpu.get_tpu_info()
        vmem_cap = int(getattr(info, "vmem_capacity_bytes", 128 * _MIB) or 128 * _MIB)
    except Exception:
        vmem_cap = 128 * _MIB
    # ~8 MiB blocks on 128 MiB-VMEM chips (v5e/v6e), ~6 MiB on v7x (64 MiB).
    target = max(2 * _MIB, min(8 * _MIB, vmem_cap // 10))
    # 2 double-buffered copies of (in + out) tiles + headroom; set explicitly so
    # the per-generation scoped-VMEM defaults are never the limiter.
    vmem_limit = int(min(vmem_cap // 2, 4 * target + 8 * _MIB))
    return int(target), vmem_limit


def _largest_divisor_leq(n: int, cap: int) -> int:
    best = 1
    i = 1
    while i * i <= n:
        if n % i == 0:
            lo, hi = i, n // i
            if lo <= cap and lo > best:
                best = lo
            if hi <= cap and hi > best:
                best = hi
        i += 1
    return best


# ----------------------------------------------------------------------------- wrapper
def zero_forward(x, *, exact=True, donate_input=False):
    """Pallas equivalent of Zero.forward: x.mul(0.0).

    exact=True  -> read x and multiply by 0.0 (exact torch IEEE semantics).
    exact=False -> write zeros without reading x (half the HBM traffic).
    """
    orig_shape = x.shape
    in_dtype = x.dtype
    if jnp.issubdtype(in_dtype, jnp.inexact):
        out_dtype = in_dtype
    else:
        # torch promotes int/bool tensors .mul(0.0) to the default float dtype.
        out_dtype = jnp.promote_types(in_dtype, jnp.float32)

    total = x.size
    if total == 0:
        return jnp.zeros(orig_shape, out_dtype)

    in_item = jnp.dtype(in_dtype).itemsize
    out_item = jnp.dtype(out_dtype).itemsize
    max_item = max(in_item, out_item)
    sublane = _sublane_multiple(in_dtype, out_dtype)
    target_bytes, vmem_limit = _vmem_budget()

    # ---- choose a flat 2D (rows, cols) view of the element stream (free reshape).
    rows = cols = None
    for cand in (2048, 1024, 512, 256, 128):            # lane-dense, unmasked stores
        if total % cand == 0:
            rows, cols = total // cand, cand
            break
    if rows is None:
        # Ragged element count: use the widest divisor as the (full) lane extent.
        # Last dim == full array dim is exempt from the 128 rule, and rows are
        # tiled with a masked partial last block -> no pad / slice HBM passes.
        cap = max(128, target_bytes // (max_item * sublane))
        c = _largest_divisor_leq(total, cap)
        if c >= 128:
            rows, cols = total // c, c
        else:
            # Near-prime element count: single-row view, tile along lanes (the
            # partial last lane-block is masked by Pallas).
            rows, cols = 1, total

    x2d = x.reshape(rows, cols)

    # ---- pick block + grid (~target_bytes per block; Pallas double-buffers DMAs).
    if rows > 1:
        tr = max(1, target_bytes // (cols * max_item))
        if tr >= rows:
            block = (rows, cols)                         # whole array, single step
        else:
            block = (max(sublane, (tr // sublane) * sublane), cols)
        grid = (pl.cdiv(rows, block[0]),)
        index_map = lambda i: (i, 0)
    else:
        # (1, cols) view: sublane pads to 8 in VMEM, so budget at 8x per element.
        tc = max(128, (target_bytes // (8 * max_item * 128)) * 128)
        if tc >= cols:
            block = (1, cols)                            # whole array, single step
        else:
            block = (1, tc)
        grid = (pl.cdiv(cols, block[1]),)
        index_map = lambda j: (0, j)

    block_spec_out = pl.BlockSpec(block, index_map)
    # "parallel" lets v7x's two TensorCores split the row/lane grid (no-op on
    # v5e/v6e).  If an xprof trace ever shows one TC idle, switch this axis to
    # pltpu.CORE_PARALLEL.
    compiler_params = pltpu.CompilerParams(
        dimension_semantics=("parallel",),
        vmem_limit_bytes=vmem_limit,
    )
    out_shape = jax.ShapeDtypeStruct((rows, cols), out_dtype)

    if exact:
        cost = pl.CostEstimate(
            flops=total, transcendentals=0,
            bytes_accessed=x.nbytes + total * out_item,
        )
        aliases = {0: 0} if (donate_input and in_dtype == out_dtype) else {}
        out2d = pl.pallas_call(
            _zero_mul_kernel,
            out_shape=out_shape,
            grid_spec=pl.GridSpec(
                grid=grid,
                in_specs=[pl.BlockSpec(block, index_map)],
                out_specs=block_spec_out,
            ),
            compiler_params=compiler_params,
            cost_estimate=cost,
            input_output_aliases=aliases,
        )(x2d)
    else:
        cost = pl.CostEstimate(
            flops=0, transcendentals=0, bytes_accessed=total * out_item,
        )
        out2d = pl.pallas_call(
            _zero_fill_kernel,
            out_shape=out_shape,
            grid_spec=pl.GridSpec(grid=grid, in_specs=[], out_specs=block_spec_out),
            compiler_params=compiler_params,
            cost_estimate=cost,
        )()

    return out2d.reshape(orig_shape)


# ----------------------------------------------------------------------------- tests
if __name__ == "__main__":
    key = jax.random.PRNGKey(0)

    # Primary: small NCHW activation (aligned, 2048 elements -> lane-dense path).
    x = jax.random.normal(key, (2, 4, 16, 16), dtype=jnp.float32)
    x = x.at[0, 0, 0, 0].set(jnp.nan)                    # verify IEEE semantics

    y = zero_forward(x)
    jax.block_until_ready(y)
    assert y.shape == x.shape and y.dtype == x.dtype
    yf = y.reshape(-1)
    assert bool(jnp.isnan(yf[0]))                        # NaN * 0 = NaN (torch.mul)
    assert bool(jnp.all(yf[1:] == 0.0))

    # Fast path: zero-fill with no HBM read (non-IEEE, opt-in).
    y_fast = zero_forward(x, exact=False)
    jax.block_until_ready(y_fast)
    assert y_fast.shape == x.shape and y_fast.dtype == x.dtype
    assert bool(jnp.all(y_fast == 0.0))

    # Ragged element count (29304, not a multiple of 128): pad-free path.
    x2 = jax.random.normal(jax.random.PRNGKey(1), (3, 8, 33, 37), dtype=jnp.float32)
    y2 = zero_forward(x2)
    jax.block_until_ready(y2)
    assert y2.shape == x2.shape and bool(jnp.all(y2 == 0.0))

    # Larger aligned activation: exercises the multi-block, row-tiled grid.
    x3 = jax.random.normal(jax.random.PRNGKey(2), (8, 96, 64, 64), dtype=jnp.float32)
    y3 = zero_forward(x3)
    jax.block_until_ready(y3)
    assert y3.shape == x3.shape and bool(jnp.all(y3 == 0.0))

    print("KERNEL_OK")
</pallas_src>

<mosaic_0001>
module attributes {stable_mosaic.version = 11 : i64} {
  func.func @_zero_mul_kernel(%arg0: i32, %arg1: memref<1x2048xf32, #tpu.memory_space<vmem>>, %arg2: memref<1x2048xf32, #tpu.memory_space<vmem>>) attributes {dimension_semantics = [#tpu.dimension_semantics<parallel>], iteration_bounds = array<i64: 1>, scalar_prefetch = 0 : i64, scratch_operands = 0 : i64, tpu.core_type = #tpu.core_type<tc>, window_params = [{transform_indices = @transform_0, window_bounds = array<i64: 1, 2048>}, {transform_indices = @transform_1, window_bounds = array<i64: 1, 2048>}]} {
    %c0 = arith.constant 0 : index
    %c0_0 = arith.constant 0 : index
    %0 = vector.load %arg1[%c0, %c0_0] : memref<1x2048xf32, #tpu.memory_space<vmem>>, vector<1x2048xf32>
    %cst = arith.constant 0.000000e+00 : f32
    %1 = vector.broadcast %cst : f32 to vector<1x2048xf32>
    %2 = arith.mulf %0, %1 : vector<1x2048xf32>
    %c0_1 = arith.constant 0 : index
    %c0_2 = arith.constant 0 : index
    %3 = vector.load %arg2[%c0_1, %c0_2] : memref<1x2048xf32, #tpu.memory_space<vmem>>, vector<1x2048xf32>
    tpu.vector_store %arg2[%c0_1, %c0_2], %2 {strides = array<i32>} : memref<1x2048xf32, #tpu.memory_space<vmem>>, vector<1x2048xf32>,
    return
  }
  func.func @transform_0(%arg0: i32) -> (i32, i32) {
    %c0_i32 = arith.constant 0 : i32
    %c0_i32_0 = arith.constant 0 : i32
    return %c0_i32, %arg0 : i32, i32
  }
  func.func @transform_1(%arg0: i32) -> (i32, i32) {
    %c0_i32 = arith.constant 0 : i32
    %c0_i32_0 = arith.constant 0 : i32
    return %c0_i32, %arg0 : i32, i32
  }
}

</mosaic_0001>

<llo_original>
// kernel: tpu_custom_call.1
$region0: #{tpu_custom_call.1}
  #allocation0 [shape = 'u32[]', space=smem, size = 0x4, offset = 0x4, fixed_abs, tag = 'smem constant byte address 0x4 - core index']
  #allocation1 [shape = 'u32[144,128]{1,0:T(1,128)}', space=vmem, size = 0x12000, scoped, tag = 'internal scratch']
  %s0 = inlined_call_operand.hbm [shape: f32[1,2048], index: 0, kind: input, shape index: {}]
  %s1 = inlined_call_operand.hbm [shape: f32[1,2048], index: 1, kind: output, shape index: {}]
  %s2 = sld [smem:[#allocation0]]
  $region18: #{tpu_custom_call.1} parent=0
    _
  %s4 = ssub.s32 1, %s2
  %s5 = scalar_select 0, %s4, %s2
  $region1: #{tpu_custom_call.1} parent=0
    #allocation2 [shape = 'u8[8192]{0}', space=vmem, size = 0x2000, scoped, tag = 'input window, operand 0, single buffered']
    #allocation3 [shape = 's32[1]{0}', space=sflag, size = 0x4, scoped, tag = 'scoped memory for tpu_custom_call.1']
    #allocation4 [shape = 's32[1]{0}', space=sflag, size = 0x4, scoped, tag = 'scoped memory for tpu_custom_call.1']
    #allocation5 [shape = 'u8[8192]{0}', space=vmem, size = 0x2000, scoped, tag = 'output window, operand 0, single buffered']
    %6 = vsyncpa [#allocation3], 0
    %7 = vsyncpa [#allocation4], 0
    // Predicated region
    $region2: #{tpu_custom_call.1} parent=1 // pred_check
      _
    $region3: #{tpu_custom_call.1} parent=1 // pred_check_branch
      %9 = sbr.rel (0) target = $region5
    $region4: #{tpu_custom_call.1} parent=1 // pred_region
      %s11 = ssub.s32 256, 256
      %12 = vsyncadd [#allocation3], %s11
      %s14 = sshll.u32 [#allocation2], 4
      %s15 = int_to_ptr.vmem [resolvable:$true] %s14
      %17 = dma.hbm_to_vmem [thread:$0]  %s0, 256, %s15, [#allocation3]
    $region5: #{tpu_custom_call.1} parent=1 // pred_fallthru
      _
    // Predicated region
    $region6: #{tpu_custom_call.1} parent=1 // pred_check
      _
    $region7: #{tpu_custom_call.1} parent=1 // pred_check_branch
      %19 = sbr.rel (0) target = $region9
    $region8: #{tpu_custom_call.1} parent=1 // pred_region
      %20 = dma.done [#allocation3], 256
    $region9: #{tpu_custom_call.1} parent=1 // pred_fallthru
      _
    %v21 = vld [vmem:[#allocation2] sm:$0xff]
    %v22 = vld [vmem:[#allocation2 + $0x8] sm:$0xff]
    %v23 = vmul.f32 %v21, 0.0
    %v24 = vmul.f32 %v22, 0.0
    %25 = vst [vmem:[#allocation5] sm:$0xff] %v23
    %26 = vst [vmem:[#allocation5 + $0x8] sm:$0xff] %v24
    // Predicated region
    $region10: #{tpu_custom_call.1} parent=1 // pred_check
      _
    $region11: #{tpu_custom_call.1} parent=1 // pred_check_branch
      %28 = sbr.rel (0) target = $region13
    $region12: #{tpu_custom_call.1} parent=1 // pred_region
      %s30 = ssub.s32 256, 256
      %31 = vsyncadd [#allocation4], %s30
      %s33 = sshll.u32 [#allocation5], 4
      %s34 = int_to_ptr.vmem [resolvable:$true] %s33
      %36 = dma.vmem_to_hbm [thread:$0]  %s34, 256, %s1, [#allocation4]
    $region13: #{tpu_custom_call.1} parent=1 // pred_fallthru
      _
    // Predicated region
    $region14: #{tpu_custom_call.1} parent=1 // pred_check
      _
    $region15: #{tpu_custom_call.1} parent=1 // pred_check_branch
      %38 = sbr.rel (0) target = $region17
    $region16: #{tpu_custom_call.1} parent=1 // pred_region
      %39 = dma.done [#allocation4], 256
    $region17: #{tpu_custom_call.1} parent=1 // pred_fallthru
      _
    %40 = vsyncpa [#allocation3], 1
    %41 = vsyncpa [#allocation4], 1

</llo_original>
